<compile_context>
chip_gen: v6e
topology: v6e:2x2x1
jax: 0.10.0
libtpu: 0.0.40
codegen_flags: <defaults>
</compile_context>

<pallas_src>
import jax
import jax.numpy as jnp
from jax.experimental import pallas as pl
from jax.experimental.pallas import tpu as pltpu


# ----------------------------------------------------------------------------
# Pallas kernel: batched-over-modes real block-complex channel contraction.
# ----------------------------------------------------------------------------
def _spectral_matmul_kernel(x_ref, w_ref, o_ref):
    # x_ref: (Kb, B,    2Cin)   lanes [0:Cin] = Re(x), [Cin:2Cin] = Im(x)
    # w_ref: (Kb, 2Cin, 2Cout)  block matrix [[wr, wi], [-wi, wr]]
    # o_ref: (Kb, B,    2Cout)  lanes [0:Cout] = Re(out), [Cout:] = Im(out)
    # Single batched MXU contraction; output is already the packed result,
    # stored directly (no slicing / concatenate epilogue).
    y = jnp.einsum('kbi,kio->kbo', x_ref[...], w_ref[...],
                   preferred_element_type=jnp.float32)
    o_ref[...] = y.astype(o_ref.dtype)


# ----------------------------------------------------------------------------
# Mode-block size selection (trace-time Python on static shapes).
# ----------------------------------------------------------------------------
def _tile_bytes(rows, cols, itemsize):
    """Conservative padded-tile VMEM footprint estimate."""
    sub = 8 * max(1, 4 // itemsize)          # f32: 8 sublanes, bf16: 16
    r = -(-rows // sub) * sub
    c = -(-cols // 128) * 128
    return r * c * itemsize


def _choose_kb(K, bytes_per_k, *, vmem_budget_bytes):
    """Largest divisor Kb of K that fits the (double-buffered) VMEM budget.

    Prefers >= 4 grid blocks (and an even count) so the 'parallel' grid axis
    keeps both v7x TensorCores busy and the pipeline has DMA/compute overlap.
    """
    kb_cap = max(1, vmem_budget_bytes // (2 * bytes_per_k))
    divisors = [d for d in range(1, K + 1) if K % d == 0]
    fitting = [d for d in divisors if d <= kb_cap] or [1]
    for pred in (lambda d: K // d >= 4 and (K // d) % 2 == 0,
                 lambda d: K // d >= 2 and (K // d) % 2 == 0,
                 lambda d: K // d >= 2,
                 lambda d: True):
        pool = [d for d in fitting if pred(d)]
        if pool:
            return max(pool)
    return 1


# ----------------------------------------------------------------------------
# Batched complex channel mixing over retained Fourier modes.
# ----------------------------------------------------------------------------
def compl_mul_modes(x_pack, w_block, *, vmem_budget_bytes=24 * 1024 * 1024):
    """x_pack: (K, B, 2Cin), w_block: (K, 2Cin, 2Cout) -> (K, B, 2Cout) f32."""
    K, B, Cin2 = x_pack.shape
    Cout2 = w_block.shape[-1]

    in_item = jnp.dtype(x_pack.dtype).itemsize
    w_item = jnp.dtype(w_block.dtype).itemsize
    # per-mode VMEM footprint: x block + w block + out block + f32 intermediate
    bytes_per_k = (_tile_bytes(B, Cin2, in_item)
                   + _tile_bytes(Cin2, Cout2, w_item)
                   + 2 * _tile_bytes(B, Cout2, 4))
    Kb = _choose_kb(K, bytes_per_k, vmem_budget_bytes=vmem_budget_bytes)
    num_blocks = K // Kb            # Kb divides K -> no per-call padding

    return pl.pallas_call(
        _spectral_matmul_kernel,
        out_shape=jax.ShapeDtypeStruct((K, B, Cout2), jnp.float32),
        grid=(num_blocks,),
        in_specs=[
            pl.BlockSpec((Kb, B, Cin2), lambda k: (k, 0, 0)),
            # NOTE: on v5e, if a trace shows exposed DMA on the weight stream,
            # add pipeline_mode=pl.Buffered(3) here.
            pl.BlockSpec((Kb, Cin2, Cout2), lambda k: (k, 0, 0)),
        ],
        out_specs=pl.BlockSpec((Kb, B, Cout2), lambda k: (k, 0, 0)),
        compiler_params=pltpu.CompilerParams(
            dimension_semantics=("parallel",),
            vmem_limit_bytes=48 * 1024 * 1024),
    )(x_pack, w_block)


# ----------------------------------------------------------------------------
# Parameter preprocessing (hoisted out of the forward; do this once).
# ----------------------------------------------------------------------------
def prepare_spectral_weights(weights1, weights2, dtype=jnp.bfloat16):
    """(Cin, Cout, m1, m2) complex x2 -> (K=2*m1*m2, 2Cin, 2Cout) real.

    Per mode, builds the block matrix [[wr, wi], [-wi, wr]] so that
    [xr | xi] @ W = [xr@wr - xi@wi | xr@wi + xi@wr] = [Re(out) | Im(out)].
    """
    Cin, Cout, m1, m2 = weights1.shape
    w = jnp.concatenate([weights1, weights2], axis=2)         # (Cin,Cout,2m1,m2)
    w = jnp.transpose(w, (2, 3, 0, 1)).reshape(2 * m1 * m2, Cin, Cout)
    wr = jnp.real(w).astype(jnp.float32)
    wi = jnp.imag(w).astype(jnp.float32)
    top = jnp.concatenate([wr, wi], axis=-1)                  # (K, Cin, 2Cout)
    bot = jnp.concatenate([-wi, wr], axis=-1)                 # (K, Cin, 2Cout)
    w_block = jnp.concatenate([top, bot], axis=1)             # (K, 2Cin, 2Cout)
    return w_block.astype(dtype)


# ----------------------------------------------------------------------------
# Forward pass (mirrors the PyTorch SpectralConv2d_fast.forward).
# ----------------------------------------------------------------------------
def spectral_conv2d_fast(x, w_block, *, modes1, modes2, out_channels):
    """x: (B, Cin, H, W) f32; w_block: from prepare_spectral_weights."""
    B, Cin, H, W = x.shape
    Cout = out_channels
    Wr = W // 2 + 1
    K = 2 * modes1 * modes2

    # TODO(synk): FFT / IFFT have no Pallas equivalent; done in plain JAX/XLA.
    x_ft = jnp.fft.rfft2(x)                                   # (B, Cin, H, Wr) c64

    # Gather retained modes (top rows -> weights1, bottom rows -> weights2)
    # and pack real|imag on the channel (lane) axis.
    xm = jnp.concatenate([x_ft[:, :, :modes1, :modes2],
                          x_ft[:, :, H - modes1:, :modes2]], axis=2)  # (B,Cin,2m1,m2)
    x_ri = jnp.concatenate([jnp.real(xm), jnp.imag(xm)], axis=1)      # (B,2Cin,2m1,m2)
    x_pack = jnp.transpose(x_ri, (2, 3, 0, 1)).reshape(K, B, 2 * Cin)
    x_pack = x_pack.astype(w_block.dtype)                             # (K, B, 2Cin)

    o = compl_mul_modes(x_pack, w_block)                      # (K, B, 2Cout) f32

    o_c = jax.lax.complex(o[..., :Cout], o[..., Cout:])       # (K, B, Cout) c64
    o_c = o_c.reshape(2, modes1, modes2, B, Cout)
    o_c = jnp.transpose(o_c, (0, 3, 4, 1, 2))                 # (2, B, Cout, m1, m2)

    if 2 * modes1 <= H:
        # Common case: build out_ft with one concat + pad (fewer HBM passes
        # than zeros + two scatters).
        mid = jnp.zeros((B, Cout, H - 2 * modes1, modes2), jnp.complex64)
        out_ft = jnp.concatenate([o_c[0], mid, o_c[1]], axis=2)       # (B,Cout,H,m2)
        out_ft = jnp.pad(out_ft, ((0, 0), (0, 0), (0, 0), (0, Wr - modes2)))
    else:
        # Overlapping mode blocks: second assignment wins, matching PyTorch.
        out_ft = jnp.zeros((B, Cout, H, Wr), dtype=jnp.complex64)
        out_ft = out_ft.at[:, :, :modes1, :modes2].set(o_c[0])
        out_ft = out_ft.at[:, :, H - modes1:, :modes2].set(o_c[1])

    return jnp.fft.irfft2(out_ft, s=(H, W))


# ----------------------------------------------------------------------------
# Pure-JAX reference (mirrors the PyTorch forward) for validation.
# ----------------------------------------------------------------------------
def _reference(x, weights1, weights2, modes1, modes2):
    B, Cin, H, W = x.shape
    Cout = weights1.shape[1]
    Wr = W // 2 + 1
    x_ft = jnp.fft.rfft2(x)
    out_ft = jnp.zeros((B, Cout, H, Wr), dtype=jnp.complex64)
    out_ft = out_ft.at[:, :, :modes1, :modes2].set(
        jnp.einsum('bixy,ioxy->boxy', x_ft[:, :, :modes1, :modes2], weights1))
    out_ft = out_ft.at[:, :, H - modes1:, :modes2].set(
        jnp.einsum('bixy,ioxy->boxy', x_ft[:, :, -modes1:, :modes2], weights2))
    return jnp.fft.irfft2(out_ft, s=(H, W))


if __name__ == "__main__":
    # Small shapes consistent with the module.
    B, Cin, Cout, H, W = 2, 4, 4, 16, 16
    modes1, modes2 = 4, 4

    key = jax.random.PRNGKey(0)
    kx, kw1r, kw1i, kw2r, kw2i = jax.random.split(key, 5)

    x = jax.random.normal(kx, (B, Cin, H, W), dtype=jnp.float32)

    # scale * torch.rand(Cin, Cout, m1, m2, dtype=cfloat)
    scale = 1.0 / (Cin * Cout)
    wshape = (Cin, Cout, modes1, modes2)
    weights1 = (scale * (jax.random.uniform(kw1r, wshape, dtype=jnp.float32)
                         + 1j * jax.random.uniform(kw1i, wshape, dtype=jnp.float32))
                ).astype(jnp.complex64)
    weights2 = (scale * (jax.random.uniform(kw2r, wshape, dtype=jnp.float32)
                         + 1j * jax.random.uniform(kw2i, wshape, dtype=jnp.float32))
                ).astype(jnp.complex64)

    ref = jax.block_until_ready(_reference(x, weights1, weights2, modes1, modes2))

    fwd = jax.jit(spectral_conv2d_fast,
                  static_argnames=("modes1", "modes2", "out_channels"))

    # Exact-precision path (f32 weights/activations): tight tolerance.
    w_f32 = jax.block_until_ready(
        prepare_spectral_weights(weights1, weights2, dtype=jnp.float32))
    out_f32 = jax.block_until_ready(
        fwd(x, w_f32, modes1=modes1, modes2=modes2, out_channels=Cout))
    assert out_f32.shape == (B, Cout, H, W), out_f32.shape
    assert jnp.allclose(out_f32, ref, atol=1e-4, rtol=1e-4), \
        float(jnp.max(jnp.abs(out_f32 - ref)))

    # Production path (bf16 weights/activations, f32 accumulation): loose tol.
    w_bf16 = jax.block_until_ready(prepare_spectral_weights(weights1, weights2))
    out_bf16 = jax.block_until_ready(
        fwd(x, w_bf16, modes1=modes1, modes2=modes2, out_channels=Cout))
    assert out_bf16.shape == (B, Cout, H, W), out_bf16.shape
    assert jnp.allclose(out_bf16, ref, atol=2e-2, rtol=2e-2), \
        float(jnp.max(jnp.abs(out_bf16 - ref)))

    print("KERNEL_OK")
</pallas_src>

<mosaic_0001>
module attributes {stable_mosaic.version = 11 : i64} {
  func.func @_spectral_matmul_kernel(%arg0: i32, %arg1: memref<8x2x8xf32, #tpu.memory_space<vmem>>, %arg2: memref<8x8x8xf32, #tpu.memory_space<vmem>>, %arg3: memref<8x2x8xf32, #tpu.memory_space<vmem>>) attributes {dimension_semantics = [#tpu.dimension_semantics<parallel>], iteration_bounds = array<i64: 4>, scalar_prefetch = 0 : i64, scratch_operands = 0 : i64, tpu.core_type = #tpu.core_type<tc>, window_params = [{transform_indices = @transform_0, window_bounds = array<i64: 8, 2, 8>}, {transform_indices = @transform_1, window_bounds = array<i64: 8, 8, 8>}, {transform_indices = @transform_2, window_bounds = array<i64: 8, 2, 8>}]} {
    %c0 = arith.constant 0 : index
    %c0_0 = arith.constant 0 : index
    %c0_1 = arith.constant 0 : index
    %0 = vector.load %arg1[%c0, %c0_0, %c0_1] : memref<8x2x8xf32, #tpu.memory_space<vmem>>, vector<8x2x8xf32>
    %c0_2 = arith.constant 0 : index
    %c0_3 = arith.constant 0 : index
    %c0_4 = arith.constant 0 : index
    %1 = vector.load %arg2[%c0_2, %c0_3, %c0_4] : memref<8x8x8xf32, #tpu.memory_space<vmem>>, vector<8x8x8xf32>
    "tpu.trace_start"() <{level = 10 : i32, message = "kbi,kio->kbo"}> : () -> ()
    %cst = arith.constant dense<0.000000e+00> : vector<8x2x8xf32>
    %2 = tpu.matmul %0, %1, %cst {dimension_numbers = #tpu.dot_dimension_numbers<[2], [1], [1], [2], [0, 0, 0, 1, 1, 2], [0], [0]>} : vector<8x2x8xf32>, vector<8x8x8xf32>, vector<8x2x8xf32> -> vector<8x2x8xf32>
    "tpu.trace_stop"() : () -> ()
    %c0_5 = arith.constant 0 : index
    %c0_6 = arith.constant 0 : index
    %c0_7 = arith.constant 0 : index
    %3 = vector.load %arg3[%c0_5, %c0_6, %c0_7] : memref<8x2x8xf32, #tpu.memory_space<vmem>>, vector<8x2x8xf32>
    tpu.vector_store %arg3[%c0_5, %c0_6, %c0_7], %2 {strides = array<i32>} : memref<8x2x8xf32, #tpu.memory_space<vmem>>, vector<8x2x8xf32>,
    return
  }
  func.func @transform_0(%arg0: i32) -> (i32, i32, i32) {
    %c0_i32 = arith.constant 0 : i32
    %c0_i32_0 = arith.constant 0 : i32
    %c0_i32_1 = arith.constant 0 : i32
    return %arg0, %c0_i32, %c0_i32_0 : i32, i32, i32
  }
  func.func @transform_1(%arg0: i32) -> (i32, i32, i32) {
    %c0_i32 = arith.constant 0 : i32
    %c0_i32_0 = arith.constant 0 : i32
    %c0_i32_1 = arith.constant 0 : i32
    return %arg0, %c0_i32, %c0_i32_0 : i32, i32, i32
  }
  func.func @transform_2(%arg0: i32) -> (i32, i32, i32) {
    %c0_i32 = arith.constant 0 : i32
    %c0_i32_0 = arith.constant 0 : i32
    %c0_i32_1 = arith.constant 0 : i32
    return %arg0, %c0_i32, %c0_i32_0 : i32, i32, i32
  }
}

</mosaic_0001>

<llo_original>
// kernel: reverse.0
$region0: #{reverse.0}
  %s0 = inlined_call_operand.vmem [shape: f32[2,4,16,7], index: 0, kind: input, shape index: {}]
  %s1 = inlined_call_operand.vmem [shape: f32[2,4,16,7], index: 1, kind: output, shape index: {}]
  $region1: #{reverse.0} parent=0
    #allocation0 [shape = 'u8[65536]{0}', space=vmem, size = 0x10000, scoped, tag = 'operand span for operand 0']
    #allocation1 [shape = 'u8[32768]{0}', space=vmem, size = 0x8000, scoped, tag = 'operand span for operand 1']
    %s2 = scalar_lea.vmem [#allocation0], 8
    // Predicated region
    $region2: #{reverse.0} parent=1 // pred_check
      _
    $region3: #{reverse.0} parent=1 // pred_check_branch
      %4 = sbr.rel (0) target = $region5
    $region4: #{reverse.0} parent=1 // pred_region
      // Predicated region
      $region6: #{reverse.0} parent=4 // pred_check
        _
      $region7: #{reverse.0} parent=4 // pred_check_branch
        %6 = sbr.rel (0) target = $region9
      $region8: #{reverse.0} parent=4 // pred_region
        // Predicated region
        $region21: #{reverse.0} parent=8 // pred_check
          _
        $region22: #{reverse.0} parent=8 // pred_check_branch
          %36 = sbr.rel (0) target = $region24
        $region23: #{reverse.0} parent=8 // pred_region
          loop: start=0, step=1, limit=1
          $region25: #{reverse.0} parent=23 // loop_pre_header
            _
          $region26: #{reverse.0} parent=23 // loop_header
            %s38 = sphi 0, %s42
            %p39 = scmp.ge.s32.totalorder %s38, 1
            %s43 = sphi %s0, %s0
            %s44 = sphi %s2, %s2
          $region27: #{reverse.0} parent=23 // loop_header_branch
            %41 = sbr.rel (%p39) target = $region31
          $region28: #{reverse.0} parent=23 // loop_body
            %v45 = vld [vmem:[%s43] sm:$0xff]
            %46 = vst [vmem:[%s44] sm:$0xff] %v45
            %v47 = vld [vmem:[%s43 + $0x8] sm:$0xff]
            %48 = vst [vmem:[%s44 + $0x10] sm:$0xff] %v47
            %v49 = vld [vmem:[%s43 + $0x10] sm:$0xff]
            %50 = vst [vmem:[%s44 + $0x20] sm:$0xff] %v49
            %v51 = vld [vmem:[%s43 + $0x18] sm:$0xff]
            %52 = vst [vmem:[%s44 + $0x30] sm:$0xff] %v51
            %v53 = vld [vmem:[%s43 + $0x20] sm:$0xff]
            %54 = vst [vmem:[%s44 + $0x40] sm:$0xff] %v53
            %v55 = vld [vmem:[%s43 + $0x28] sm:$0xff]
            %56 = vst [vmem:[%s44 + $0x50] sm:$0xff] %v55
            %v57 = vld [vmem:[%s43 + $0x30] sm:$0xff]
            %58 = vst [vmem:[%s44 + $0x60] sm:$0xff] %v57
            %v59 = vld [vmem:[%s43 + $0x38] sm:$0xff]
            %60 = vst [vmem:[%s44 + $0x70] sm:$0xff] %v59
          $region29: #{reverse.0} parent=23 // loop_footer
            %s42 = sadd.s32 1, %s38
          $region30: #{reverse.0} parent=23 // loop_footer_branch
            %37 = sbr.rel target = $region26
          $region31: #{reverse.0} parent=23 // loop_exit
            _
        $region24: #{reverse.0} parent=8 // pred_fallthru
          _
        // Predicated region
        $region32: #{reverse.0} parent=8 // pred_check
          _
        $region33: #{reverse.0} parent=8 // pred_check_branch
          %62 = sbr.rel target = $region35
        $region34: #{reverse.0} parent=8 // pred_region
          _
        $region35: #{reverse.0} parent=8 // pred_fallthru
          _
      $region9: #{reverse.0} parent=4 // pred_fallthru
        _
      // Predicated region
      $region10: #{reverse.0} parent=4 // pred_check
        _
      $region11: #{reverse.0} parent=4 // pred_check_branch
        %8 = sbr.rel target = $region13
      $region12: #{reverse.0} parent=4 // pred_region
        %s10 = ssub.s32 256, 1
        loop: start=0, step=1, limit=1
        $region14: #{reverse.0} parent=12 // loop_pre_header
          _
        $region15: #{reverse.0} parent=12 // loop_header
          %s12 = sphi 0, %s16
          %p13 = scmp.ge.s32.totalorder %s12, 1
          %s17 = sphi %s0, %s0
          %s18 = sphi %s2, %s2
        $region16: #{reverse.0} parent=12 // loop_header_branch
          %15 = sbr.rel (%p13) target = $region20
        $region17: #{reverse.0} parent=12 // loop_body
          %v19 = vld [vmem:[%s17] sm:%s10]
          %20 = vst [vmem:[%s18] sm:%s10] %v19
          %v21 = vld [vmem:[%s17 + $0x8] sm:%s10]
          %22 = vst [vmem:[%s18 + $0x10] sm:%s10] %v21
          %v23 = vld [vmem:[%s17 + $0x10] sm:%s10]
          %24 = vst [vmem:[%s18 + $0x20] sm:%s10] %v23
          %v25 = vld [vmem:[%s17 + $0x18] sm:%s10]
          %26 = vst [vmem:[%s18 + $0x30] sm:%s10] %v25
          %v27 = vld [vmem:[%s17 + $0x20] sm:%s10]
          %28 = vst [vmem:[%s18 + $0x40] sm:%s10] %v27
          %v29 = vld [vmem:[%s17 + $0x28] sm:%s10]
          %30 = vst [vmem:[%s18 + $0x50] sm:%s10] %v29
          %v31 = vld [vmem:[%s17 + $0x30] sm:%s10]
          %32 = vst [vmem:[%s18 + $0x60] sm:%s10] %v31
          %v33 = vld [vmem:[%s17 + $0x38] sm:%s10]
          %34 = vst [vmem:[%s18 + $0x70] sm:%s10] %v33
        $region18: #{reverse.0} parent=12 // loop_footer
          %s16 = sadd.s32 1, %s12
        $region19: #{reverse.0} parent=12 // loop_footer_branch
          %11 = sbr.rel target = $region15
        $region20: #{reverse.0} parent=12 // loop_exit
          _
      $region13: #{reverse.0} parent=4 // pred_fallthru
        _
    $region5: #{reverse.0} parent=1 // pred_fallthru
      _
    %63 = vnop
    %s64 = scalar_lea.vmem [#allocation0], 7
    %v65 = vld [vmem:[%s64] ss:$-1 sm:$0xff]
    %v66 = vrot.slane %v65, 1
    %67 = vst [vmem:[#allocation1] sm:$0xff] %v66
    %s68 = scalar_lea.vmem [#allocation0], 8
    %s69 = scalar_lea.vmem %s68, 7 [#allocation0]
    %v70 = vld [vmem:[%s69] ss:$-1 sm:$0xff]
    %v71 = vrot.slane %v70, 1
    %v72 = vlaneseq
    %v73 = vshrl.u32 %v72, 7
    %vm74 = vcmp.lt.s32.totalorder %v73, 7
    %75 = vst.msk [vmem:[#allocation1] sm:$0xff] %vm74, %v71
    %s76 = scalar_lea.vmem [#allocation1], 8
    %s77 = scalar_lea.vmem [#allocation0], 16
    %s78 = scalar_lea.vmem %s77, 7 [#allocation0]
    %v79 = vld [vmem:[%s78] ss:$-1 sm:$0xff]
    %v80 = vrot.slane %v79, 1
    %81 = vst [vmem:[%s76] sm:$0xff] %v80
    %s82 = scalar_lea.vmem %s77, 8 [#allocation0]
    %s83 = scalar_lea.vmem %s82, 7 [#allocation0]
    %v84 = vld [vmem:[%s83] ss:$-1 sm:$0xff]
    %v85 = vrot.slane %v84, 1
    %v86 = vlaneseq
    %v87 = vshrl.u32 %v86, 7
    %vm88 = vcmp.lt.s32.totalorder %v87, 7
    %89 = vst.msk [vmem:[%s76] sm:$0xff] %vm88, %v85
    %s90 = scalar_lea.vmem [#allocation1], 16
    %s91 = scalar_lea.vmem [#allocation0], 32
    %s92 = scalar_lea.vmem %s91, 7 [#allocation0]
    %v93 = vld [vmem:[%s92] ss:$-1 sm:$0xff]
    %v94 = vrot.slane %v93, 1
    %95 = vst [vmem:[%s90] sm:$0xff] %v94
    %s96 = scalar_lea.vmem %s91, 8 [#allocation0]
    %s97 = scalar_lea.vmem %s96, 7 [#allocation0]
    %v98 = vld [vmem:[%s97] ss:$-1 sm:$0xff]
    %v99 = vrot.slane %v98, 1
    %v100 = vlaneseq
    %v101 = vshrl.u32 %v100, 7
    %vm102 = vcmp.lt.s32.totalorder %v101, 7
    %103 = vst.msk [vmem:[%s90] sm:$0xff] %vm102, %v99
    %s104 = scalar_lea.vmem [#allocation1], 24
    %s105 = scalar_lea.vmem [#allocation0], 48
    %s106 = scalar_lea.vmem %s105, 7 [#allocation0]
    %v107 = vld [vmem:[%s106] ss:$-1 sm:$0xff]
    %v108 = vrot.slane %v107, 1
    %109 = vst [vmem:[%s104] sm:$0xff] %v108
    %s110 = scalar_lea.vmem %s105, 8 [#allocation0]
    %s111 = scalar_lea.vmem %s110, 7 [#allocation0]
    %v112 = vld [vmem:[%s111] ss:$-1 sm:$0xff]
    %v113 = vrot.slane %v112, 1
    %v114 = vlaneseq
    %v115 = vshrl.u32 %v114, 7
    %vm116 = vcmp.lt.s32.totalorder %v115, 7
    %117 = vst.msk [vmem:[%s104] sm:$0xff] %vm116, %v113
    %s118 = scalar_lea.vmem [#allocation1], 32
    %s119 = scalar_lea.vmem [#allocation0], 64
    %s120 = scalar_lea.vmem %s119, 7 [#allocation0]
    %v121 = vld [vmem:[%s120] ss:$-1 sm:$0xff]
    %v122 = vrot.slane %v121, 1
    %123 = vst [vmem:[%s118] sm:$0xff] %v122
    %s124 = scalar_lea.vmem %s119, 8 [#allocation0]
    %s125 = scalar_lea.vmem %s124, 7 [#allocation0]
    %v126 = vld [vmem:[%s125] ss:$-1 sm:$0xff]
    %v127 = vrot.slane %v126, 1
    %v128 = vlaneseq
    %v129 = vshrl.u32 %v128, 7
    %vm130 = vcmp.lt.s32.totalorder %v129, 7
    %131 = vst.msk [vmem:[%s118] sm:$0xff] %vm130, %v127
    %s132 = scalar_lea.vmem [#allocation1], 40
    %s133 = scalar_lea.vmem [#allocation0], 80
    %s134 = scalar_lea.vmem %s133, 7 [#allocation0]
    %v135 = vld [vmem:[%s134] ss:$-1 sm:$0xff]
    %v136 = vrot.slane %v135, 1
    %137 = vst [vmem:[%s132] sm:$0xff] %v136
    %s138 = scalar_lea.vmem %s133, 8 [#allocation0]
    %s139 = scalar_lea.vmem %s138, 7 [#allocation0]
    %v140 = vld [vmem:[%s139] ss:$-1 sm:$0xff]
    %v141 = vrot.slane %v140, 1
    %v142 = vlaneseq
    %v143 = vshrl.u32 %v142, 7
    %vm144 = vcmp.lt.s32.totalorder %v143, 7
    %145 = vst.msk [vmem:[%s132] sm:$0xff] %vm144, %v141
    %s146 = scalar_lea.vmem [#allocation1], 48
    %s147 = scalar_lea.vmem [#allocation0], 96
    %s148 = scalar_lea.vmem %s147, 7 [#allocation0]
    %v149 = vld [vmem:[%s148] ss:$-1 sm:$0xff]
    %v150 = vrot.slane %v149, 1
    %151 = vst [vmem:[%s146] sm:$0xff] %v150
    %s152 = scalar_lea.vmem %s147, 8 [#allocation0]
    %s153 = scalar_lea.vmem %s152, 7 [#allocation0]
    %v154 = vld [vmem:[%s153] ss:$-1 sm:$0xff]
    %v155 = vrot.slane %v154, 1
    %v156 = vlaneseq
    %v157 = vshrl.u32 %v156, 7
    %vm158 = vcmp.lt.s32.totalorder %v157, 7
    %159 = vst.msk [vmem:[%s146] sm:$0xff] %vm158, %v155
    %s160 = scalar_lea.vmem [#allocation1], 56
    %s161 = scalar_lea.vmem [#allocation0], 112
    %s162 = scalar_lea.vmem %s161, 7 [#allocation0]
    %v163 = vld [vmem:[%s162] ss:$-1 sm:$0xff]
    %v164 = vrot.slane %v163, 1
    %165 = vst [vmem:[%s160] sm:$0xff] %v164
    %s166 = scalar_lea.vmem %s161, 8 [#allocation0]
    %s167 = scalar_lea.vmem %s166, 7 [#allocation0]
    %v168 = vld [vmem:[%s167] ss:$-1 sm:$0xff]
    %v169 = vrot.slane %v168, 1
    %v170 = vlaneseq
    %v171 = vshrl.u32 %v170, 7
    %vm172 = vcmp.lt.s32.totalorder %v171, 7
    %173 = vst.msk [vmem:[%s160] sm:$0xff] %vm172, %v169
    // Predicated region
    $region36: #{reverse.0} parent=1 // pred_check
      _
    $region37: #{reverse.0} parent=1 // pred_check_branch
      %175 = sbr.rel (0) target = $region39
    $region38: #{reverse.0} parent=1 // pred_region
      // Predicated region
      $region40: #{reverse.0} parent=38 // pred_check
        _
      $region41: #{reverse.0} parent=38 // pred_check_branch
        %177 = sbr.rel (0) target = $region43
      $region42: #{reverse.0} parent=38 // pred_region
        // Predicated region
        $region55: #{reverse.0} parent=42 // pred_check
          _
        $region56: #{reverse.0} parent=42 // pred_check_branch
          %207 = sbr.rel (0) target = $region58
        $region57: #{reverse.0} parent=42 // pred_region
          loop: start=0, step=1, limit=1
          $region59: #{reverse.0} parent=57 // loop_pre_header
            _
          $region60: #{reverse.0} parent=57 // loop_header
            %s209 = sphi 0, %s213
            %p210 = scmp.ge.s32.totalorder %s209, 1
            %s214 = sphi [#allocation1], [#allocation1]
            %s215 = sphi %s1, %s1
          $region61: #{reverse.0} parent=57 // loop_header_branch
            %212 = sbr.rel (%p210) target = $region65
          $region62: #{reverse.0} parent=57 // loop_body
            %v216 = vld [vmem:[%s214] sm:$0xff]
            %217 = vst [vmem:[%s215] sm:$0xff] %v216
            %v218 = vld [vmem:[%s214 + $0x8] sm:$0xff]
            %219 = vst [vmem:[%s215 + $0x8] sm:$0xff] %v218
            %v220 = vld [vmem:[%s214 + $0x10] sm:$0xff]
            %221 = vst [vmem:[%s215 + $0x10] sm:$0xff] %v220
            %v222 = vld [vmem:[%s214 + $0x18] sm:$0xff]
            %223 = vst [vmem:[%s215 + $0x18] sm:$0xff] %v222
            %v224 = vld [vmem:[%s214 + $0x20] sm:$0xff]
            %225 = vst [vmem:[%s215 + $0x20] sm:$0xff] %v224
            %v226 = vld [vmem:[%s214 + $0x28] sm:$0xff]
            %227 = vst [vmem:[%s215 + $0x28] sm:$0xff] %v226
            %v228 = vld [vmem:[%s214 + $0x30] sm:$0xff]
            %229 = vst [vmem:[%s215 + $0x30] sm:$0xff] %v228
            %v230 = vld [vmem:[%s214 + $0x38] sm:$0xff]
            %231 = vst [vmem:[%s215 + $0x38] sm:$0xff] %v230
          $region63: #{reverse.0} parent=57 // loop_footer
            %s213 = sadd.s32 1, %s209
          $region64: #{reverse.0} parent=57 // loop_footer_branch
            %208 = sbr.rel target = $region60
          $region65: #{reverse.0} parent=57 // loop_exit
            _
        $region58: #{reverse.0} parent=42 // pred_fallthru
          _
        // Predicated region
        $region66: #{reverse.0} parent=42 // pred_check
          _
        $region67: #{reverse.0} parent=42 // pred_check_branch
          %233 = sbr.rel target = $region69
        $region68: #{reverse.0} parent=42 // pred_region
          _
        $region69: #{reverse.0} parent=42 // pred_fallthru
          _
      $region43: #{reverse.0} parent=38 // pred_fallthru
        _
      // Predicated region
      $region44: #{reverse.0} parent=38 // pred_check
        _
      $region45: #{reverse.0} parent=38 // pred_check_branch
        %179 = sbr.rel target = $region47
      $region46: #{reverse.0} parent=38 // pred_region
        %s181 = ssub.s32 256, 1
        loop: start=0, step=1, limit=1
        $region48: #{reverse.0} parent=46 // loop_pre_header
          _
        $region49: #{reverse.0} parent=46 // loop_header
          %s183 = sphi 0, %s187
          %p184 = scmp.ge.s32.totalorder %s183, 1
          %s188 = sphi [#allocation1], [#allocation1]
          %s189 = sphi %s1, %s1
        $region50: #{reverse.0} parent=46 // loop_header_branch
          %186 = sbr.rel (%p184) target = $region54
        $region51: #{reverse.0} parent=46 // loop_body
          %v190 = vld [vmem:[%s188] sm:%s181]
          %191 = vst [vmem:[%s189] sm:%s181] %v190
          %v192 = vld [vmem:[%s188 + $0x8] sm:%s181]
          %193 = vst [vmem:[%s189 + $0x8] sm:%s181] %v192
          %v194 = vld [vmem:[%s188 + $0x10] sm:%s181]
          %195 = vst [vmem:[%s189 + $0x10] sm:%s181] %v194
          %v196 = vld [vmem:[%s188 + $0x18] sm:%s181]
          %197 = vst [vmem:[%s189 + $0x18] sm:%s181] %v196
          %v198 = vld [vmem:[%s188 + $0x20] sm:%s181]
          %199 = vst [vmem:[%s189 + $0x20] sm:%s181] %v198
          %v200 = vld [vmem:[%s188 + $0x28] sm:%s181]
          %201 = vst [vmem:[%s189 + $0x28] sm:%s181] %v200
          %v202 = vld [vmem:[%s188 + $0x30] sm:%s181]
          %203 = vst [vmem:[%s189 + $0x30] sm:%s181] %v202
          %v204 = vld [vmem:[%s188 + $0x38] sm:%s181]
          %205 = vst [vmem:[%s189 + $0x38] sm:%s181] %v204
        $region52: #{reverse.0} parent=46 // loop_footer
          %s187 = sadd.s32 1, %s183
        $region53: #{reverse.0} parent=46 // loop_footer_branch
          %182 = sbr.rel target = $region49
        $region54: #{reverse.0} parent=46 // loop_exit
          _
      $region47: #{reverse.0} parent=38 // pred_fallthru
        _
    $region39: #{reverse.0} parent=1 // pred_fallthru
      _
    %234 = vnop

// kernel: spectral_conv2d_fast.1
$region0: #{spectral_conv2d_fast.1}
  #allocation0 [shape = 'u32[]', space=smem, size = 0x4, offset = 0x4, fixed_abs, tag = 'smem constant byte address 0x4 - core index']
  #allocation1 [shape = 'u32[144,128]{1,0:T(1,128)}', space=vmem, size = 0x12000, scoped, tag = 'internal scratch']
  %s0 = inlined_call_operand.vmem [shape: f32[32,2,8], index: 0, kind: input, shape index: {}]
  %s1 = inlined_call_operand.vmem [shape: f32[32,8,8], index: 1, kind: input, shape index: {}]
  %s2 = inlined_call_operand.vmem [shape: f32[32,2,8], index: 2, kind: output, shape index: {}]
  %s3 = sld [smem:[#allocation0]]
  $region41: #{spectral_conv2d_fast.1} parent=0
    _
  %s5 = ssub.s32 1, %s3
  %s6 = scalar_select 0, %s5, %s3
  loop: start=0, step=1, limit=6
  $region2: #{spectral_conv2d_fast.1} parent=0 // loop_pre_header
    _
  $region3: #{spectral_conv2d_fast.1} parent=0 // loop_header
    %s8 = sphi 0, %s12
    %p9 = scmp.ge.s32.totalorder %s8, 6
    %s18 = sphi 0, %s20
    %s21 = sphi 0, %s18
    %s22 = sphi 0, %s21
    %s38 = sphi 0, %s22
    %s44 = sphi 0, %s46
    %s47 = sphi 0, %s44
    %s48 = sphi 0, %s47
    %s64 = sphi 0, %s48
    %s70 = sphi 0, %s72
    %s73 = sphi 0, %s70
    %s74 = sphi 0, %s73
    %s90 = sphi 0, %s74
  $region4: #{spectral_conv2d_fast.1} parent=0 // loop_header_branch
    %11 = sbr.rel (%p9) target = $region8
  $region5: #{spectral_conv2d_fast.1} parent=0 // loop_body
    %s13 = ssub.s32 %s8, 1
    %s14 = ssub.s32 %s8, 2
    %s15 = sadd.s32 %s8, 1
    %s16 = ssub.s32 %s8, %s15
    %p17 = scmp.eq.s32.totalorder %s16, 0
    %s19 = sadd.s32 %s18, 1
    %s20 = scalar_select %p17, %s18, %s19
    %p23 = pneg %p17
    %p24 = scmp.eq.s32.totalorder %s8, 3
    %p25 = por %p23, %p24
    %p26 = scmp.ne.s32.totalorder %s18, %s21
    %p27 = scmp.eq.s32.totalorder %s8, 0
    %p28 = por %p26, %p27
    %p29 = scmp.ne.s32.totalorder %s18, %s21
    %p30 = scmp.eq.s32.totalorder %s13, 3
    %p31 = por %p29, %p30
    %p32 = scmp.ne.s32.totalorder %s21, %s22
    %p33 = scmp.eq.s32.totalorder %s13, 0
    %p34 = por %p32, %p33
    %p35 = scmp.ne.s32.totalorder %s21, %s22
    %p36 = scmp.eq.s32.totalorder %s14, 3
    %p37 = por %p35, %p36
    %p39 = scmp.ne.s32.totalorder %s22, %s38
    %p40 = scmp.eq.s32.totalorder %s14, 0
    %p41 = por %p39, %p40
    %s42 = ssub.s32 %s8, %s15
    %p43 = scmp.eq.s32.totalorder %s42, 0
    %s45 = sadd.s32 %s44, 1
    %s46 = scalar_select %p43, %s44, %s45
    %p49 = pneg %p43
    %p50 = scmp.eq.s32.totalorder %s8, 3
    %p51 = por %p49, %p50
    %p52 = scmp.ne.s32.totalorder %s44, %s47
    %p53 = scmp.eq.s32.totalorder %s8, 0
    %p54 = por %p52, %p53
    %p55 = scmp.ne.s32.totalorder %s44, %s47
    %p56 = scmp.eq.s32.totalorder %s13, 3
    %p57 = por %p55, %p56
    %p58 = scmp.ne.s32.totalorder %s47, %s48
    %p59 = scmp.eq.s32.totalorder %s13, 0
    %p60 = por %p58, %p59
    %p61 = scmp.ne.s32.totalorder %s47, %s48
    %p62 = scmp.eq.s32.totalorder %s14, 3
    %p63 = por %p61, %p62
    %p65 = scmp.ne.s32.totalorder %s48, %s64
    %p66 = scmp.eq.s32.totalorder %s14, 0
    %p67 = por %p65, %p66
    %s68 = ssub.s32 %s8, %s15
    %p69 = scmp.eq.s32.totalorder %s68, 0
    %s71 = sadd.s32 %s70, 1
    %s72 = scalar_select %p69, %s70, %s71
    %p75 = pneg %p69
    %p76 = scmp.eq.s32.totalorder %s8, 3
    %p77 = por %p75, %p76
    %p78 = scmp.ne.s32.totalorder %s70, %s73
    %p79 = scmp.eq.s32.totalorder %s8, 0
    %p80 = por %p78, %p79
    %p81 = scmp.ne.s32.totalorder %s70, %s73
    %p82 = scmp.eq.s32.totalorder %s13, 3
    %p83 = por %p81, %p82
    %p84 = scmp.ne.s32.totalorder %s73, %s74
    %p85 = scmp.eq.s32.totalorder %s13, 0
    %p86 = por %p84, %p85
    %p87 = scmp.ne.s32.totalorder %s73, %s74
    %p88 = scmp.eq.s32.totalorder %s14, 3
    %p89 = por %p87, %p88
    %p91 = scmp.ne.s32.totalorder %s74, %s90
    %p92 = scmp.eq.s32.totalorder %s14, 0
    %p93 = por %p91, %p92
    %p94 = scmp.le.s32.totalorder 1, %s8
    %p95 = scmp.lt.s32.totalorder %s8, 5
    %p96 = pnand %p94, %p95
    %p97 = pneg %p96
    // Predicated region
    $region9: #{spectral_conv2d_fast.1} parent=5 // pred_check
      _
    $region10: #{spectral_conv2d_fast.1} parent=5 // pred_check_branch
      %99 = sbr.rel (%p96) target = $region12
    $region11: #{spectral_conv2d_fast.1} parent=5 // pred_region
      %s100 = ssub.s32 %s8, 1
    $region12: #{spectral_conv2d_fast.1} parent=5 // pred_fallthru
      _
    %p101 = scmp.lt.s32.totalorder %s8, 4
    // Predicated region
    $region13: #{spectral_conv2d_fast.1} parent=5 // pred_check
      %p102 = pneg %p101
    $region14: #{spectral_conv2d_fast.1} parent=5 // pred_check_branch
      %104 = sbr.rel (%p102) target = $region16
    $region15: #{spectral_conv2d_fast.1} parent=5 // pred_region
      // Predicated region
      $region17: #{spectral_conv2d_fast.1} parent=15 // pred_check
        %p105 = pneg %p28
      $region18: #{spectral_conv2d_fast.1} parent=15 // pred_check_branch
        %107 = sbr.rel (%p105) target = $region20
      $region19: #{spectral_conv2d_fast.1} parent=15 // pred_region
        %s108 = smul.u32 8, %s8
        %p109 = scmp.lt.s32.totalorder %s108, 31
        %s110 = scalar_select %p109, %s108, 31
        %s111 = smul.addr %s110, 2
        %s112 = scalar_lea.vmem %s0, %s111
        %s113 = smul.u32 8, %s8
      $region20: #{spectral_conv2d_fast.1} parent=15 // pred_fallthru
        _
      // Predicated region
      $region21: #{spectral_conv2d_fast.1} parent=15 // pred_check
        %p114 = pneg %p54
      $region22: #{spectral_conv2d_fast.1} parent=15 // pred_check_branch
        %116 = sbr.rel (%p114) target = $region24
      $region23: #{spectral_conv2d_fast.1} parent=15 // pred_region
        %s117 = smul.u32 8, %s8
        %p118 = scmp.lt.s32.totalorder %s117, 31
        %s119 = scalar_select %p118, %s117, 31
        %s120 = smul.addr %s119, 8
        %s121 = scalar_lea.vmem %s1, %s120
        %s122 = smul.u32 8, %s8
      $region24: #{spectral_conv2d_fast.1} parent=15 // pred_fallthru
        _
    $region16: #{spectral_conv2d_fast.1} parent=5 // pred_fallthru
      _
    %p123 = scmp.le.s32.totalorder 1, %s8
    %p124 = scmp.lt.s32.totalorder %s8, 5
    %p125 = pnand %p123, %p124
    %p126 = pneg %p125
    // Predicated region
    $region25: #{spectral_conv2d_fast.1} parent=5 // pred_check
      _
    $region26: #{spectral_conv2d_fast.1} parent=5 // pred_check_branch
      %128 = sbr.rel (%p125) target = $region28
    $region27: #{spectral_conv2d_fast.1} parent=5 // pred_region
      %s129 = ssub.s32 %s8, 1
      %s130 = smul.u32 8, %s13
      %p131 = scmp.lt.s32.totalorder %s130, 31
      %s132 = scalar_select %p131, %s130, 31
      %s133 = smul.addr %s132, 2
      %s134 = scalar_lea.vmem %s0, %s133
      %p135 = pneg %p34
      %p136 = pneg %p31
      %s137 = smul.u32 8, %s13
      %p138 = scmp.lt.s32.totalorder %s137, 31
      %s139 = scalar_select %p138, %s137, 31
      %s140 = smul.addr %s139, 8
      %s141 = scalar_lea.vmem %s1, %s140
      %p142 = pneg %p60
      %p143 = pneg %p57
      %p144 = pneg %p86
      %p145 = pneg %p83
      %s146 = smul.u32 8, %s13
      %p147 = scmp.lt.s32.totalorder %s146, 31
      %s148 = scalar_select %p147, %s146, 31
      %s149 = smul.addr %s148, 2
      %s150 = scalar_lea.vmem %s2, %s149
      %s151 = smul.u32 8, %s13
      %p152 = scmp.lt.s32.totalorder %s151, 31
      %s153 = scalar_select %p152, %s151, 31
      %s154 = smul.addr %s153, 2
      %s155 = scalar_lea.vmem %s0, %s154
      %s156 = smul.u32 8, %s13
      %s157 = smul.u32 8, %s13
      %p158 = scmp.lt.s32.totalorder %s157, 31
      %s159 = scalar_select %p158, %s157, 31
      %s160 = smul.addr %s159, 8
      %s161 = scalar_lea.vmem %s1, %s160
      %s162 = smul.u32 8, %s13
      %s163 = smul.u32 8, %s13
      %p164 = scmp.lt.s32.totalorder %s163, 31
      %s165 = scalar_select %p164, %s163, 31
      %s166 = smul.addr %s165, 2
      %s167 = scalar_lea.vmem %s2, %s166
      %s168 = smul.u32 8, %s13
      %v169 = vld [vmem:[%s155] sm:$0x3]
      %v170 = vld [vmem:[%s155 + $0x2] sm:$0x3]
      %v171 = vld [vmem:[%s155 + $0x4] sm:$0x3]
      %v172 = vld [vmem:[%s155 + $0x6] sm:$0x3]
      %v173 = vld [vmem:[%s155 + $0x8] sm:$0x3]
      %v174 = vld [vmem:[%s155 + $0xa] sm:$0x3]
      %v175 = vld [vmem:[%s155 + $0xc] sm:$0x3]
      %v176 = vld [vmem:[%s155 + $0xe] sm:$0x3]
      %v177 = vld [vmem:[%s161] sm:$0xff]
      %v178 = vld [vmem:[%s161 + $0x8] sm:$0xff]
      %v179 = vld [vmem:[%s161 + $0x10] sm:$0xff]
      %v180 = vld [vmem:[%s161 + $0x18] sm:$0xff]
      %v181 = vld [vmem:[%s161 + $0x20] sm:$0xff]
      %v182 = vld [vmem:[%s161 + $0x28] sm:$0xff]
      %v183 = vld [vmem:[%s161 + $0x30] sm:$0xff]
      %v184 = vld [vmem:[%s161 + $0x38] sm:$0xff]
      %vm185 = vcmask 64512
      %v187 = vsel %vm185, %v169, 0
      %189 = vmatprep.subr.mxu0 0.0
      %190 = vmatpush1.msra.mxu0 0.0
      %191 = vmatprep.subr.mxu0 0.0
      %192 = vmatpush1.msra.mxu0 0.0
      %193 = vmatprep.subr.mxu0 0.0
      %194 = vmatpush1.msra.mxu0 0.0
      %195 = vmatprep.subr.mxu0 0.0
      %196 = vmatpush1.msra.mxu0 0.0
      %197 = vmatprep.subr.mxu0 0.0
      %198 = vmatpush1.msra.mxu0 0.0
      %199 = vmatprep.subr.mxu0 0.0
      %200 = vmatpush1.msra.mxu0 0.0
      %201 = vmatprep.subr.mxu0 0.0
      %202 = vmatpush1.msra.mxu0 0.0
      %203 = vmatprep.subr.mxu0 0.0
      %204 = vmatpush1.msra.mxu0 0.0
      %205 = vmatprep.subr.mxu0 0.0
      %206 = vmatpush1.msra.mxu0 0.0
      %207 = vmatprep.subr.mxu0 0.0
      %208 = vmatpush1.msra.mxu0 0.0
      %209 = vmatprep.subr.mxu0 0.0
      %210 = vmatpush1.msra.mxu0 0.0
      %211 = vmatprep.subr.mxu0 0.0
      %212 = vmatpush1.msra.mxu0 0.0
      %213 = vmatprep.subr.mxu0 0.0
      %214 = vmatpush1.msra.mxu0 0.0
      %215 = vmatprep.subr.mxu0 0.0
      %216 = vmatpush1.msra.mxu0 0.0
      %217 = vmatprep.subr.mxu0 0.0
      %218 = vmatpush1.msra.mxu0 0.0
      %219 = vmatprep.subr.mxu0 0.0
      %220 = vmatpush1.msra.mxu0 %v177
      %221 = vmatprep.subr.mxu0 0.0
      %222 = vmatpush2.msra.mxu0 0.0
      %223 = vmatprep.subr.mxu0 0.0
      %224 = vmatpush2.msra.mxu0 0.0
      %225 = vmatprep.subr.mxu0 0.0
      %226 = vmatpush2.msra.mxu0 0.0
      %227 = vmatprep.subr.mxu0 0.0
      %228 = vmatpush2.msra.mxu0 0.0
      %229 = vmatprep.subr.mxu0 0.0
      %230 = vmatpush2.msra.mxu0 0.0
      %231 = vmatprep.subr.mxu0 0.0
      %232 = vmatpush2.msra.mxu0 0.0
      %233 = vmatprep.subr.mxu0 0.0
      %234 = vmatpush2.msra.mxu0 0.0
      %235 = vmatprep.subr.mxu0 0.0
      %236 = vmatpush2.msra.mxu0 0.0
      %237 = vmatprep.subr.mxu0 0.0
      %238 = vmatpush2.msra.mxu0 0.0
      %239 = vmatprep.subr.mxu0 0.0
      %240 = vmatpush2.msra.mxu0 0.0
      %241 = vmatprep.subr.mxu0 0.0
      %242 = vmatpush2.msra.mxu0 0.0
      %243 = vmatprep.subr.mxu0 0.0
      %244 = vmatpush2.msra.mxu0 0.0
      %245 = vmatprep.subr.mxu0 0.0
      %246 = vmatpush2.msra.mxu0 0.0
      %247 = vmatprep.subr.mxu0 0.0
      %248 = vmatpush2.msra.mxu0 0.0
      %249 = vmatprep.subr.mxu0 0.0
      %250 = vmatpush2.msra.mxu0 0.0
      %251 = vmatprep.subr.mxu0 0.0
      %252 = vmatpush2.msra.mxu0 0.0
      %253 = vmatprep.mubr.f32.mxu0 0.0
      %254 = vmatmul.mubr.f32.gmra.mxu0 %v187
      %v255 = vpop.f32.mrf.mxu0
      %v256 = vadd.f32 0.0, %v255
      %v257 = vpop.f32.mrf.mxu0
      %258 = vdwg.mxu0
      %v260 = vsel %vm185, %v170, 0
      %262 = vmatprep.subr.mxu0 0.0
      %263 = vmatpush1.msra.mxu0 0.0
      %264 = vmatprep.subr.mxu0 0.0
      %265 = vmatpush1.msra.mxu0 0.0
      %266 = vmatprep.subr.mxu0 0.0
      %267 = vmatpush1.msra.mxu0 0.0
      %268 = vmatprep.subr.mxu0 0.0
      %269 = vmatpush1.msra.mxu0 0.0
      %270 = vmatprep.subr.mxu0 0.0
      %271 = vmatpush1.msra.mxu0 0.0
      %272 = vmatprep.subr.mxu0 0.0
      %273 = vmatpush1.msra.mxu0 0.0
      %274 = vmatprep.subr.mxu0 0.0
      %275 = vmatpush1.msra.mxu0 0.0
      %276 = vmatprep.subr.mxu0 0.0
      %277 = vmatpush1.msra.mxu0 0.0
      %278 = vmatprep.subr.mxu0 0.0
      %279 = vmatpush1.msra.mxu0 0.0
      %280 = vmatprep.subr.mxu0 0.0
      %281 = vmatpush1.msra.mxu0 0.0
      %282 = vmatprep.subr.mxu0 0.0
      %283 = vmatpush1.msra.mxu0 0.0
      %284 = vmatprep.subr.mxu0 0.0
      %285 = vmatpush1.msra.mxu0 0.0
      %286 = vmatprep.subr.mxu0 0.0
      %287 = vmatpush1.msra.mxu0 0.0
      %288 = vmatprep.subr.mxu0 0.0
      %289 = vmatpush1.msra.mxu0 0.0
      %290 = vmatprep.subr.mxu0 0.0
      %291 = vmatpush1.msra.mxu0 0.0
      %292 = vmatprep.subr.mxu0 0.0
      %293 = vmatpush1.msra.mxu0 %v178
      %294 = vmatprep.subr.mxu0 0.0
      %295 = vmatpush2.msra.mxu0 0.0
      %296 = vmatprep.subr.mxu0 0.0
      %297 = vmatpush2.msra.mxu0 0.0
      %298 = vmatprep.subr.mxu0 0.0
      %299 = vmatpush2.msra.mxu0 0.0
      %300 = vmatprep.subr.mxu0 0.0
      %301 = vmatpush2.msra.mxu0 0.0
      %302 = vmatprep.subr.mxu0 0.0
      %303 = vmatpush2.msra.mxu0 0.0
      %304 = vmatprep.subr.mxu0 0.0
      %305 = vmatpush2.msra.mxu0 0.0
      %306 = vmatprep.subr.mxu0 0.0
      %307 = vmatpush2.msra.mxu0 0.0
      %308 = vmatprep.subr.mxu0 0.0
      %309 = vmatpush2.msra.mxu0 0.0
      %310 = vmatprep.subr.mxu0 0.0
      %311 = vmatpush2.msra.mxu0 0.0
      %312 = vmatprep.subr.mxu0 0.0
      %313 = vmatpush2.msra.mxu0 0.0
      %314 = vmatprep.subr.mxu0 0.0
      %315 = vmatpush2.msra.mxu0 0.0
      %316 = vmatprep.subr.mxu0 0.0
      %317 = vmatpush2.msra.mxu0 0.0
      %318 = vmatprep.subr.mxu0 0.0
      %319 = vmatpush2.msra.mxu0 0.0
      %320 = vmatprep.subr.mxu0 0.0
      %321 = vmatpush2.msra.mxu0 0.0
      %322 = vmatprep.subr.mxu0 0.0
      %323 = vmatpush2.msra.mxu0 0.0
      %324 = vmatprep.subr.mxu0 0.0
      %325 = vmatpush2.msra.mxu0 0.0
      %326 = vmatprep.mubr.f32.mxu0 0.0
      %327 = vmatmul.mubr.f32.gmra.mxu0 %v260
      %v328 = vpop.f32.mrf.mxu0
      %v329 = vadd.f32 0.0, %v328
      %v330 = vpop.f32.mrf.mxu0
      %331 = vdwg.mxu0
      %v333 = vsel %vm185, %v171, 0
      %335 = vmatprep.subr.mxu0 0.0
      %336 = vmatpush1.msra.mxu0 0.0
      %337 = vmatprep.subr.mxu0 0.0
      %338 = vmatpush1.msra.mxu0 0.0
      %339 = vmatprep.subr.mxu0 0.0
      %340 = vmatpush1.msra.mxu0 0.0
      %341 = vmatprep.subr.mxu0 0.0
      %342 = vmatpush1.msra.mxu0 0.0
      %343 = vmatprep.subr.mxu0 0.0
      %344 = vmatpush1.msra.mxu0 0.0
      %345 = vmatprep.subr.mxu0 0.0
      %346 = vmatpush1.msra.mxu0 0.0
      %347 = vmatprep.subr.mxu0 0.0
      %348 = vmatpush1.msra.mxu0 0.0
      %349 = vmatprep.subr.mxu0 0.0
      %350 = vmatpush1.msra.mxu0 0.0
      %351 = vmatprep.subr.mxu0 0.0
      %352 = vmatpush1.msra.mxu0 0.0
      %353 = vmatprep.subr.mxu0 0.0
      %354 = vmatpush1.msra.mxu0 0.0
      %355 = vmatprep.subr.mxu0 0.0
      %356 = vmatpush1.msra.mxu0 0.0
      %357 = vmatprep.subr.mxu0 0.0
      %358 = vmatpush1.msra.mxu0 0.0
      %359 = vmatprep.subr.mxu0 0.0
      %360 = vmatpush1.msra.mxu0 0.0
      %361 = vmatprep.subr.mxu0 0.0
      %362 = vmatpush1.msra.mxu0 0.0
      %363 = vmatprep.subr.mxu0 0.0
      %364 = vmatpush1.msra.mxu0 0.0
      %365 = vmatprep.subr.mxu0 0.0
      %366 = vmatpush1.msra.mxu0 %v179
      %367 = vmatprep.subr.mxu0 0.0
      %368 = vmatpush2.msra.mxu0 0.0
      %369 = vmatprep.subr.mxu0 0.0
      %370 = vmatpush2.msra.mxu0 0.0
      %371 = vmatprep.subr.mxu0 0.0
      %372 = vmatpush2.msra.mxu0 0.0
      %373 = vmatprep.subr.mxu0 0.0
      %374 = vmatpush2.msra.mxu0 0.0
      %375 = vmatprep.subr.mxu0 0.0
      %376 = vmatpush2.msra.mxu0 0.0
      %377 = vmatprep.subr.mxu0 0.0
      %378 = vmatpush2.msra.mxu0 0.0
      %379 = vmatprep.subr.mxu0 0.0
      %380 = vmatpush2.msra.mxu0 0.0
      %381 = vmatprep.subr.mxu0 0.0
      %382 = vmatpush2.msra.mxu0 0.0
      %383 = vmatprep.subr.mxu0 0.0
      %384 = vmatpush2.msra.mxu0 0.0
      %385 = vmatprep.subr.mxu0 0.0
      %386 = vmatpush2.msra.mxu0 0.0
      %387 = vmatprep.subr.mxu0 0.0
      %388 = vmatpush2.msra.mxu0 0.0
      %389 = vmatprep.subr.mxu0 0.0
      %390 = vmatpush2.msra.mxu0 0.0
      %391 = vmatprep.subr.mxu0 0.0
      %392 = vmatpush2.msra.mxu0 0.0
      %393 = vmatprep.subr.mxu0 0.0
      %394 = vmatpush2.msra.mxu0 0.0
      %395 = vmatprep.subr.mxu0 0.0
      %396 = vmatpush2.msra.mxu0 0.0
      %397 = vmatprep.subr.mxu0 0.0
      %398 = vmatpush2.msra.mxu0 0.0
      %399 = vmatprep.mubr.f32.mxu0 0.0
      %400 = vmatmul.mubr.f32.gmra.mxu0 %v333
      %v401 = vpop.f32.mrf.mxu0
      %v402 = vadd.f32 0.0, %v401
      %v403 = vpop.f32.mrf.mxu0
      %404 = vdwg.mxu0
      %v406 = vsel %vm185, %v172, 0
      %408 = vmatprep.subr.mxu0 0.0
      %409 = vmatpush1.msra.mxu0 0.0
      %410 = vmatprep.subr.mxu0 0.0
      %411 = vmatpush1.msra.mxu0 0.0
      %412 = vmatprep.subr.mxu0 0.0
      %413 = vmatpush1.msra.mxu0 0.0
      %414 = vmatprep.subr.mxu0 0.0
      %415 = vmatpush1.msra.mxu0 0.0
      %416 = vmatprep.subr.mxu0 0.0
      %417 = vmatpush1.msra.mxu0 0.0
      %418 = vmatprep.subr.mxu0 0.0
      %419 = vmatpush1.msra.mxu0 0.0
      %420 = vmatprep.subr.mxu0 0.0
      %421 = vmatpush1.msra.mxu0 0.0
      %422 = vmatprep.subr.mxu0 0.0
      %423 = vmatpush1.msra.mxu0 0.0
      %424 = vmatprep.subr.mxu0 0.0
      %425 = vmatpush1.msra.mxu0 0.0
      %426 = vmatprep.subr.mxu0 0.0
      %427 = vmatpush1.msra.mxu0 0.0
      %428 = vmatprep.subr.mxu0 0.0
      %429 = vmatpush1.msra.mxu0 0.0
      %430 = vmatprep.subr.mxu0 0.0
      %431 = vmatpush1.msra.mxu0 0.0
      %432 = vmatprep.subr.mxu0 0.0
      %433 = vmatpush1.msra.mxu0 0.0
      %434 = vmatprep.subr.mxu0 0.0
      %435 = vmatpush1.msra.mxu0 0.0
      %436 = vmatprep.subr.mxu0 0.0
      %437 = vmatpush1.msra.mxu0 0.0
      %438 = vmatprep.subr.mxu0 0.0
      %439 = vmatpush1.msra.mxu0 %v180
      %440 = vmatprep.subr.mxu0 0.0
      %441 = vmatpush2.msra.mxu0 0.0
      %442 = vmatprep.subr.mxu0 0.0
      %443 = vmatpush2.msra.mxu0 0.0
      %444 = vmatprep.subr.mxu0 0.0
      %445 = vmatpush2.msra.mxu0 0.0
      %446 = vmatprep.subr.mxu0 0.0
      %447 = vmatpush2.msra.mxu0 0.0
      %448 = vmatprep.subr.mxu0 0.0
      %449 = vmatpush2.msra.mxu0 0.0
      %450 = vmatprep.subr.mxu0 0.0
      %451 = vmatpush2.msra.mxu0 0.0
      %452 = vmatprep.subr.mxu0 0.0
      %453 = vmatpush2.msra.mxu0 0.0
      %454 = vmatprep.subr.mxu0 0.0
      %455 = vmatpush2.msra.mxu0 0.0
      %456 = vmatprep.subr.mxu0 0.0
      %457 = vmatpush2.msra.mxu0 0.0
      %458 = vmatprep.subr.mxu0 0.0
      %459 = vmatpush2.msra.mxu0 0.0
      %460 = vmatprep.subr.mxu0 0.0
      %461 = vmatpush2.msra.mxu0 0.0
      %462 = vmatprep.subr.mxu0 0.0
      %463 = vmatpush2.msra.mxu0 0.0
      %464 = vmatprep.subr.mxu0 0.0
      %465 = vmatpush2.msra.mxu0 0.0
      %466 = vmatprep.subr.mxu0 0.0
      %467 = vmatpush2.msra.mxu0 0.0
      %468 = vmatprep.subr.mxu0 0.0
      %469 = vmatpush2.msra.mxu0 0.0
      %470 = vmatprep.subr.mxu0 0.0
      %471 = vmatpush2.msra.mxu0 0.0
      %472 = vmatprep.mubr.f32.mxu0 0.0
      %473 = vmatmul.mubr.f32.gmra.mxu0 %v406
      %v474 = vpop.f32.mrf.mxu0
      %v475 = vadd.f32 0.0, %v474
      %v476 = vpop.f32.mrf.mxu0
      %477 = vdwg.mxu0
      %v479 = vsel %vm185, %v173, 0
      %481 = vmatprep.subr.mxu0 0.0
      %482 = vmatpush1.msra.mxu0 0.0
      %483 = vmatprep.subr.mxu0 0.0
      %484 = vmatpush1.msra.mxu0 0.0
      %485 = vmatprep.subr.mxu0 0.0
      %486 = vmatpush1.msra.mxu0 0.0
      %487 = vmatprep.subr.mxu0 0.0
      %488 = vmatpush1.msra.mxu0 0.0
      %489 = vmatprep.subr.mxu0 0.0
      %490 = vmatpush1.msra.mxu0 0.0
      %491 = vmatprep.subr.mxu0 0.0
      %492 = vmatpush1.msra.mxu0 0.0
      %493 = vmatprep.subr.mxu0 0.0
      %494 = vmatpush1.msra.mxu0 0.0
      %495 = vmatprep.subr.mxu0 0.0
      %496 = vmatpush1.msra.mxu0 0.0
      %497 = vmatprep.subr.mxu0 0.0
      %498 = vmatpush1.msra.mxu0 0.0
      %499 = vmatprep.subr.mxu0 0.0
      %500 = vmatpush1.msra.mxu0 0.0
      %501 = vmatprep.subr.mxu0 0.0
      %502 = vmatpush1.msra.mxu0 0.0
      %503 = vmatprep.subr.mxu0 0.0
      %504 = vmatpush1.msra.mxu0 0.0
      %505 = vmatprep.subr.mxu0 0.0
      %506 = vmatpush1.msra.mxu0 0.0
      %507 = vmatprep.subr.mxu0 0.0
      %508 = vmatpush1.msra.mxu0 0.0
      %509 = vmatprep.subr.mxu0 0.0
      %510 = vmatpush1.msra.mxu0 0.0
      %511 = vmatprep.subr.mxu0 0.0
      %512 = vmatpush1.msra.mxu0 %v181
      %513 = vmatprep.subr.mxu0 0.0
      %514 = vmatpush2.msra.mxu0 0.0
      %515 = vmatprep.subr.mxu0 0.0
      %516 = vmatpush2.msra.mxu0 0.0
      %517 = vmatprep.subr.mxu0 0.0
      %518 = vmatpush2.msra.mxu0 0.0
      %519 = vmatprep.subr.mxu0 0.0
      %520 = vmatpush2.msra.mxu0 0.0
      %521 = vmatprep.subr.mxu0 0.0
      %522 = vmatpush2.msra.mxu0 0.0
      %523 = vmatprep.subr.mxu0 0.0
      %524 = vmatpush2.msra.mxu0 0.0
      %525 = vmatprep.subr.mxu0 0.0
      %526 = vmatpush2.msra.mxu0 0.0
      %527 = vmatprep.subr.mxu0 0.0
      %528 = vmatpush2.msra.mxu0 0.0
      %529 = vmatprep.subr.mxu0 0.0
      %530 = vmatpush2.msra.mxu0 0.0
      %531 = vmatprep.subr.mxu0 0.0
      %532 = vmatpush2.msra.mxu0 0.0
      %533 = vmatprep.subr.mxu0 0.0
      %534 = vmatpush2.msra.mxu0 0.0
      %535 = vmatprep.subr.mxu0 0.0
      %536 = vmatpush2.msra.mxu0 0.0
      %537 = vmatprep.subr.mxu0 0.0
      %538 = vmatpush2.msra.mxu0 0.0
      %539 = vmatprep.subr.mxu0 0.0
      %540 = vmatpush2.msra.mxu0 0.0
      %541 = vmatprep.subr.mxu0 0.0
      %542 = vmatpush2.msra.mxu0 0.0
      %543 = vmatprep.subr.mxu0 0.0
      %544 = vmatpush2.msra.mxu0 0.0
      %545 = vmatprep.mubr.f32.mxu0 0.0
      %546 = vmatmul.mubr.f32.gmra.mxu0 %v479
      %v547 = vpop.f32.mrf.mxu0
      %v548 = vadd.f32 0.0, %v547
      %v549 = vpop.f32.mrf.mxu0
      %550 = vdwg.mxu0
      %v552 = vsel %vm185, %v174, 0
      %554 = vmatprep.subr.mxu0 0.0
      %555 = vmatpush1.msra.mxu0 0.0
      %556 = vmatprep.subr.mxu0 0.0
      %557 = vmatpush1.msra.mxu0 0.0
      %558 = vmatprep.subr.mxu0 0.0
      %559 = vmatpush1.msra.mxu0 0.0
      %560 = vmatprep.subr.mxu0 0.0
      %561 = vmatpush1.msra.mxu0 0.0
      %562 = vmatprep.subr.mxu0 0.0
      %563 = vmatpush1.msra.mxu0 0.0
      %564 = vmatprep.subr.mxu0 0.0
      %565 = vmatpush1.msra.mxu0 0.0
      %566 = vmatprep.subr.mxu0 0.0
      %567 = vmatpush1.msra.mxu0 0.0
      %568 = vmatprep.subr.mxu0 0.0
      %569 = vmatpush1.msra.mxu0 0.0
      %570 = vmatprep.subr.mxu0 0.0
      %571 = vmatpush1.msra.mxu0 0.0
      %572 = vmatprep.subr.mxu0 0.0
      %573 = vmatpush1.msra.mxu0 0.0
      %574 = vmatprep.subr.mxu0 0.0
      %575 = vmatpush1.msra.mxu0 0.0
      %576 = vmatprep.subr.mxu0 0.0
      %577 = vmatpush1.msra.mxu0 0.0
      %578 = vmatprep.subr.mxu0 0.0
      %579 = vmatpush1.msra.mxu0 0.0
      %580 = vmatprep.subr.mxu0 0.0
      %581 = vmatpush1.msra.mxu0 0.0
      %582 = vmatprep.subr.mxu0 0.0
      %583 = vmatpush1.msra.mxu0 0.0
      %584 = vmatprep.subr.mxu0 0.0
      %585 = vmatpush1.msra.mxu0 %v182
      %586 = vmatprep.subr.mxu0 0.0
      %587 = vmatpush2.msra.mxu0 0.0
      %588 = vmatprep.subr.mxu0 0.0
      %589 = vmatpush2.msra.mxu0 0.0
      %590 = vmatprep.subr.mxu0 0.0
      %591 = vmatpush2.msra.mxu0 0.0
      %592 = vmatprep.subr.mxu0 0.0
      %593 = vmatpush2.msra.mxu0 0.0
      %594 = vmatprep.subr.mxu0 0.0
      %595 = vmatpush2.msra.mxu0 0.0
      %596 = vmatprep.subr.mxu0 0.0
      %597 = vmatpush2.msra.mxu0 0.0
      %598 = vmatprep.subr.mxu0 0.0
      %599 = vmatpush2.msra.mxu0 0.0
      %600 = vmatprep.subr.mxu0 0.0
      %601 = vmatpush2.msra.mxu0 0.0
      %602 = vmatprep.subr.mxu0 0.0
      %603 = vmatpush2.msra.mxu0 0.0
      %604 = vmatprep.subr.mxu0 0.0
      %605 = vmatpush2.msra.mxu0 0.0
      %606 = vmatprep.subr.mxu0 0.0
      %607 = vmatpush2.msra.mxu0 0.0
      %608 = vmatprep.subr.mxu0 0.0
      %609 = vmatpush2.msra.mxu0 0.0
      %610 = vmatprep.subr.mxu0 0.0
      %611 = vmatpush2.msra.mxu0 0.0
      %612 = vmatprep.subr.mxu0 0.0
      %613 = vmatpush2.msra.mxu0 0.0
      %614 = vmatprep.subr.mxu0 0.0
      %615 = vmatpush2.msra.mxu0 0.0
      %616 = vmatprep.subr.mxu0 0.0
      %617 = vmatpush2.msra.mxu0 0.0
      %618 = vmatprep.mubr.f32.mxu0 0.0
      %619 = vmatmul.mubr.f32.gmra.mxu0 %v552
      %v620 = vpop.f32.mrf.mxu0
      %v621 = vadd.f32 0.0, %v620
      %v622 = vpop.f32.mrf.mxu0
      %623 = vdwg.mxu0
      %v625 = vsel %vm185, %v175, 0
      %627 = vmatprep.subr.mxu0 0.0
      %628 = vmatpush1.msra.mxu0 0.0
      %629 = vmatprep.subr.mxu0 0.0
      %630 = vmatpush1.msra.mxu0 0.0
      %631 = vmatprep.subr.mxu0 0.0
      %632 = vmatpush1.msra.mxu0 0.0
      %633 = vmatprep.subr.mxu0 0.0
      %634 = vmatpush1.msra.mxu0 0.0
      %635 = vmatprep.subr.mxu0 0.0
      %636 = vmatpush1.msra.mxu0 0.0
      %637 = vmatprep.subr.mxu0 0.0
      %638 = vmatpush1.msra.mxu0 0.0
      %639 = vmatprep.subr.mxu0 0.0
      %640 = vmatpush1.msra.mxu0 0.0
      %641 = vmatprep.subr.mxu0 0.0
      %642 = vmatpush1.msra.mxu0 0.0
      %643 = vmatprep.subr.mxu0 0.0
      %644 = vmatpush1.msra.mxu0 0.0
      %645 = vmatprep.subr.mxu0 0.0
      %646 = vmatpush1.msra.mxu0 0.0
      %647 = vmatprep.subr.mxu0 0.0
      %648 = vmatpush1.msra.mxu0 0.0
      %649 = vmatprep.subr.mxu0 0.0
      %650 = vmatpush1.msra.mxu0 0.0
      %651 = vmatprep.subr.mxu0 0.0
      %652 = vmatpush1.msra.mxu0 0.0
      %653 = vmatprep.subr.mxu0 0.0
      %654 = vmatpush1.msra.mxu0 0.0
      %655 = vmatprep.subr.mxu0 0.0
      %656 = vmatpush1.msra.mxu0 0.0
      %657 = vmatprep.subr.mxu0 0.0
      %658 = vmatpush1.msra.mxu0 %v183
      %659 = vmatprep.subr.mxu0 0.0
      %660 = vmatpush2.msra.mxu0 0.0
      %661 = vmatprep.subr.mxu0 0.0
      %662 = vmatpush2.msra.mxu0 0.0
      %663 = vmatprep.subr.mxu0 0.0
      %664 = vmatpush2.msra.mxu0 0.0
      %665 = vmatprep.subr.mxu0 0.0
      %666 = vmatpush2.msra.mxu0 0.0
      %667 = vmatprep.subr.mxu0 0.0
      %668 = vmatpush2.msra.mxu0 0.0
      %669 = vmatprep.subr.mxu0 0.0
      %670 = vmatpush2.msra.mxu0 0.0
      %671 = vmatprep.subr.mxu0 0.0
      %672 = vmatpush2.msra.mxu0 0.0
      %673 = vmatprep.subr.mxu0 0.0
      %674 = vmatpush2.msra.mxu0 0.0
      %675 = vmatprep.subr.mxu0 0.0
      %676 = vmatpush2.msra.mxu0 0.0
      %677 = vmatprep.subr.mxu0 0.0
      %678 = vmatpush2.msra.mxu0 0.0
      %679 = vmatprep.subr.mxu0 0.0
      %680 = vmatpush2.msra.mxu0 0.0
      %681 = vmatprep.subr.mxu0 0.0
      %682 = vmatpush2.msra.mxu0 0.0
      %683 = vmatprep.subr.mxu0 0.0
      %684 = vmatpush2.msra.mxu0 0.0
      %685 = vmatprep.subr.mxu0 0.0
      %686 = vmatpush2.msra.mxu0 0.0
      %687 = vmatprep.subr.mxu0 0.0
      %688 = vmatpush2.msra.mxu0 0.0
      %689 = vmatprep.subr.mxu0 0.0
      %690 = vmatpush2.msra.mxu0 0.0
      %691 = vmatprep.mubr.f32.mxu0 0.0
      %692 = vmatmul.mubr.f32.gmra.mxu0 %v625
      %v693 = vpop.f32.mrf.mxu0
      %v694 = vadd.f32 0.0, %v693
      %v695 = vpop.f32.mrf.mxu0
      %696 = vdwg.mxu0
      %v698 = vsel %vm185, %v176, 0
      %700 = vmatprep.subr.mxu0 0.0
      %701 = vmatpush1.msra.mxu0 0.0
      %702 = vmatprep.subr.mxu0 0.0
      %703 = vmatpush1.msra.mxu0 0.0
      %704 = vmatprep.subr.mxu0 0.0
      %705 = vmatpush1.msra.mxu0 0.0
      %706 = vmatprep.subr.mxu0 0.0
      %707 = vmatpush1.msra.mxu0 0.0
      %708 = vmatprep.subr.mxu0 0.0
      %709 = vmatpush1.msra.mxu0 0.0
      %710 = vmatprep.subr.mxu0 0.0
      %711 = vmatpush1.msra.mxu0 0.0
      %712 = vmatprep.subr.mxu0 0.0
      %713 = vmatpush1.msra.mxu0 0.0
      %714 = vmatprep.subr.mxu0 0.0
      %715 = vmatpush1.msra.mxu0 0.0
      %716 = vmatprep.subr.mxu0 0.0
      %717 = vmatpush1.msra.mxu0 0.0
      %718 = vmatprep.subr.mxu0 0.0
      %719 = vmatpush1.msra.mxu0 0.0
      %720 = vmatprep.subr.mxu0 0.0
      %721 = vmatpush1.msra.mxu0 0.0
      %722 = vmatprep.subr.mxu0 0.0
      %723 = vmatpush1.msra.mxu0 0.0
      %724 = vmatprep.subr.mxu0 0.0
      %725 = vmatpush1.msra.mxu0 0.0
      %726 = vmatprep.subr.mxu0 0.0
      %727 = vmatpush1.msra.mxu0 0.0
      %728 = vmatprep.subr.mxu0 0.0
      %729 = vmatpush1.msra.mxu0 0.0
      %730 = vmatprep.subr.mxu0 0.0
      %731 = vmatpush1.msra.mxu0 %v184
      %732 = vmatprep.subr.mxu0 0.0
      %733 = vmatpush2.msra.mxu0 0.0
      %734 = vmatprep.subr.mxu0 0.0
      %735 = vmatpush2.msra.mxu0 0.0
      %736 = vmatprep.subr.mxu0 0.0
      %737 = vmatpush2.msra.mxu0 0.0
      %738 = vmatprep.subr.mxu0 0.0
      %739 = vmatpush2.msra.mxu0 0.0
      %740 = vmatprep.subr.mxu0 0.0
      %741 = vmatpush2.msra.mxu0 0.0
      %742 = vmatprep.subr.mxu0 0.0
      %743 = vmatpush2.msra.mxu0 0.0
      %744 = vmatprep.subr.mxu0 0.0
      %745 = vmatpush2.msra.mxu0 0.0
      %746 = vmatprep.subr.mxu0 0.0
      %747 = vmatpush2.msra.mxu0 0.0
      %748 = vmatprep.subr.mxu0 0.0
      %749 = vmatpush2.msra.mxu0 0.0
      %750 = vmatprep.subr.mxu0 0.0
      %751 = vmatpush2.msra.mxu0 0.0
      %752 = vmatprep.subr.mxu0 0.0
      %753 = vmatpush2.msra.mxu0 0.0
      %754 = vmatprep.subr.mxu0 0.0
      %755 = vmatpush2.msra.mxu0 0.0
      %756 = vmatprep.subr.mxu0 0.0
      %757 = vmatpush2.msra.mxu0 0.0
      %758 = vmatprep.subr.mxu0 0.0
      %759 = vmatpush2.msra.mxu0 0.0
      %760 = vmatprep.subr.mxu0 0.0
      %761 = vmatpush2.msra.mxu0 0.0
      %762 = vmatprep.subr.mxu0 0.0
      %763 = vmatpush2.msra.mxu0 0.0
      %764 = vmatprep.mubr.f32.mxu0 0.0
      %765 = vmatmul.mubr.f32.gmra.mxu0 %v698
      %v766 = vpop.f32.mrf.mxu0
      %v767 = vadd.f32 0.0, %v766
      %v768 = vpop.f32.mrf.mxu0
      %769 = vdwg.mxu0
      %vm770 = vcmask 58368
      %771 = vst.msk [vmem:[%s167] sm:$0x3] %vm770, %v256
      %772 = vst.msk [vmem:[%s167 + $0x2] sm:$0x3] %vm770, %v329
      %773 = vst.msk [vmem:[%s167 + $0x4] sm:$0x3] %vm770, %v402
      %774 = vst.msk [vmem:[%s167 + $0x6] sm:$0x3] %vm770, %v475
      %775 = vst.msk [vmem:[%s167 + $0x8] sm:$0x3] %vm770, %v548
      %776 = vst.msk [vmem:[%s167 + $0xa] sm:$0x3] %vm770, %v621
      %777 = vst.msk [vmem:[%s167 + $0xc] sm:$0x3] %vm770, %v694
      %778 = vst.msk [vmem:[%s167 + $0xe] sm:$0x3] %vm770, %v767
      %s779 = smul.u32 8, %s13
      %p780 = scmp.lt.s32.totalorder %s779, 31
      %s781 = scalar_select %p780, %s779, 31
      %s782 = smul.addr %s781, 2
      %s783 = scalar_lea.vmem %s2, %s782
      // Predicated region
      $region29: #{spectral_conv2d_fast.1} parent=27 // pred_check
        %p784 = pneg %p83
      $region30: #{spectral_conv2d_fast.1} parent=27 // pred_check_branch
        %786 = sbr.rel (%p784) target = $region32
      $region31: #{spectral_conv2d_fast.1} parent=27 // pred_region
        %s787 = smul.u32 8, %s13
      $region32: #{spectral_conv2d_fast.1} parent=27 // pred_fallthru
        _
    $region28: #{spectral_conv2d_fast.1} parent=5 // pred_fallthru
      _
    %p788 = scmp.le.s32.totalorder 2, %s8
    // Predicated region
    $region33: #{spectral_conv2d_fast.1} parent=5 // pred_check
      %p789 = pneg %p788
    $region34: #{spectral_conv2d_fast.1} parent=5 // pred_check_branch
      %791 = sbr.rel (%p789) target = $region36
    $region35: #{spectral_conv2d_fast.1} parent=5 // pred_region
      %s792 = ssub.s32 %s8, 2
      // Predicated region
      $region37: #{spectral_conv2d_fast.1} parent=35 // pred_check
        %p793 = pneg %p89
      $region38: #{spectral_conv2d_fast.1} parent=35 // pred_check_branch
        %795 = sbr.rel (%p793) target = $region40
      $region39: #{spectral_conv2d_fast.1} parent=35 // pred_region
        %s796 = smul.u32 8, %s14
        %p797 = scmp.lt.s32.totalorder %s796, 31
        %s798 = scalar_select %p797, %s796, 31
        %s799 = smul.addr %s798, 2
        %s800 = scalar_lea.vmem %s2, %s799
      $region40: #{spectral_conv2d_fast.1} parent=35 // pred_fallthru
        _
    $region36: #{spectral_conv2d_fast.1} parent=5 // pred_fallthru
      _
  $region6: #{spectral_conv2d_fast.1} parent=0 // loop_footer
    %s12 = sadd.s32 1, %s8
  $region7: #{spectral_conv2d_fast.1} parent=0 // loop_footer_branch
    %7 = sbr.rel target = $region3
  $region8: #{spectral_conv2d_fast.1} parent=0 // loop_exit
    _

</llo_original>
